<compile_context>
chip_gen: v7x
topology: tpu7x:2x2x1
jax: 0.10.0
libtpu: 0.0.40
codegen_flags: <defaults>
</compile_context>

<pallas_src>
import functools

import jax
import jax.numpy as jnp
from jax.experimental import pallas as pl
from jax.experimental.pallas import tpu as pltpu


def _two_stage_average_kernel(x_ref, w_ref, b_ref, o_ref, acc_ref):
    # x_ref : (bB, hw_blk, C)   input tile (channels on lanes)
    # w_ref : (C, CLS_PAD)      classifier weight, pre-scaled by 1/(H*W), zero-padded
    # b_ref : (1, CLS_PAD)      classifier bias, zero-padded
    # o_ref : (bB, CLS_PAD)     lane-dense logits block
    # acc_ref: (bB, C) f32      pooled-sum accumulator (persists across spatial steps)
    s = pl.program_id(1)

    @pl.when(s == 0)
    def _():
        acc_ref[...] = jnp.zeros_like(acc_ref)

    # Sum over the spatial (second-minor) axis, accumulating in f32.
    acc_ref[...] += jnp.sum(x_ref[...], axis=1, dtype=jnp.float32)

    @pl.when(s == pl.num_programs(1) - 1)
    def _():
        pooled = acc_ref[...]  # (bB, C) f32; mean scale already folded into w
        logits = (
            jnp.dot(pooled, w_ref[...], preferred_element_type=jnp.float32)
            + b_ref[...]
        )
        o_ref[...] = logits.astype(o_ref.dtype)


def _pick_batch_block(batch, cap=64):
    """Largest block <= cap that divides batch and satisfies the (8,128) rule."""
    if batch <= cap:
        return batch  # full extent is always legal
    start = cap - (cap % 8)
    for blk in range(start, 7, -8):
        if batch % blk == 0:
            return blk
    return batch  # fall back to the full batch


def _pick_spatial_block(hw, batch_block, channels, itemsize,
                        budget_bytes=2 * 1024 * 1024):
    """Largest multiple-of-8 divisor of hw keeping one x block under budget."""
    row_bytes = max(1, batch_block * channels * itemsize)
    cap = max(8, budget_bytes // row_bytes)
    cap -= cap % 8
    if hw <= cap:
        return hw  # full extent (single reduction step)
    for blk in range(cap, 7, -8):
        if hw % blk == 0:
            return blk
    return hw  # no aligned divisor -> single full-extent step


def two_stage_average_forward(x_nchw, weight, bias, *, seg_mode=0,
                              batch_block=None, hw_block=None):
    """Forward pass of TwoStageAverage.

    x_nchw : (B, C, H, W)   activations (PyTorch NCHW layout)
    weight : (classes, C)   nn.Linear weight
    bias   : (classes,)     nn.Linear bias
    """
    B, C, H, W = x_nchw.shape
    classes = weight.shape[0]
    HW = H * W

    # ---- wrapper-side layout plumbing (no per-element compute in the hot loop) ----
    # channels last -> lane axis; spatial -> second-minor (reduction) axis
    x = jnp.transpose(x_nchw, (0, 2, 3, 1)).reshape(B, HW, C)

    # Fold the 1/(H*W) mean scale into the weight (one-time O(C*classes) op).
    w_scaled = (weight.T.astype(jnp.float32)) / float(HW)          # (C, classes)

    # Lane-dense output: pad the class dim up to a multiple of 128.
    cls_pad = max(128, ((classes + 127) // 128) * 128)
    w_pad = jnp.zeros((C, cls_pad), jnp.float32).at[:, :classes].set(w_scaled)
    b_pad = jnp.zeros((1, cls_pad), jnp.float32).at[:, :classes].set(
        bias.astype(jnp.float32))

    # ---- tiling ----
    itemsize = jnp.dtype(x.dtype).itemsize
    if batch_block is None:
        batch_block = _pick_batch_block(B)
    if hw_block is None:
        hw_block = _pick_spatial_block(HW, batch_block, C, itemsize)
    assert B % batch_block == 0 and (batch_block % 8 == 0 or batch_block == B)
    assert HW % hw_block == 0 and (hw_block % 8 == 0 or hw_block == HW)

    grid = (B // batch_block, HW // hw_block)

    cost = pl.CostEstimate(
        flops=int(2 * B * C * HW + 2 * B * C * cls_pad),
        transcendentals=0,
        bytes_accessed=int(x.size * itemsize + w_pad.size * 4
                           + b_pad.size * 4 + B * cls_pad * 4),
    )

    out = pl.pallas_call(
        _two_stage_average_kernel,
        out_shape=jax.ShapeDtypeStruct((B, cls_pad), jnp.float32),
        grid_spec=pltpu.PrefetchScalarGridSpec(
            num_scalar_prefetch=0,
            grid=grid,
            in_specs=[
                pl.BlockSpec((batch_block, hw_block, C), lambda b, s: (b, s, 0)),
                pl.BlockSpec((C, cls_pad), lambda b, s: (0, 0)),
                pl.BlockSpec((1, cls_pad), lambda b, s: (0, 0)),
            ],
            out_specs=pl.BlockSpec((batch_block, cls_pad), lambda b, s: (b, 0)),
            scratch_shapes=[pltpu.VMEM((batch_block, C), jnp.float32)],
        ),
        compiler_params=pltpu.CompilerParams(
            dimension_semantics=("parallel", "arbitrary"),
            vmem_limit_bytes=32 * 1024 * 1024,
        ),
        cost_estimate=cost,
    )(x, w_pad, b_pad)

    logits = out[:, :classes]
    if seg_mode == 1:
        # seg_mode==1 branch of the module: softmax prob of class 1 (glue, outside kernel).
        return jax.nn.softmax(logits, axis=1)[:, 1:2]
    return logits


if __name__ == "__main__":
    # Small shapes consistent with the module: batch=2, in_channels=4, 16x16 spatial, 3 classes.
    B, C, H, W, CLASSES = 2, 4, 16, 16, 3

    key = jax.random.PRNGKey(0)
    kx, kw, kb = jax.random.split(key, 3)

    x = jax.random.normal(kx, (B, C, H, W), dtype=jnp.float32)

    # Deterministic init mimicking nn.Linear(in_channels, classes).
    bound = 1.0 / (C ** 0.5)
    weight = jax.random.uniform(kw, (CLASSES, C), minval=-bound, maxval=bound,
                                dtype=jnp.float32)
    bias = jax.random.uniform(kb, (CLASSES,), minval=-bound, maxval=bound,
                              dtype=jnp.float32)

    # Force a 2-step spatial reduction grid (HW=256, block=128) to exercise the
    # accumulator init/finalize path as well.
    fwd = functools.partial(two_stage_average_forward, hw_block=128)
    out = fwd(x, weight, bias)
    out = jax.block_until_ready(out)

    # Pure-JAX reference of the same math (avg-pool + linear).
    ref = jnp.mean(x, axis=(2, 3)) @ weight.T + bias
    assert out.shape == (B, CLASSES)
    assert jnp.allclose(out, ref, atol=1e-5, rtol=1e-5)

    print("KERNEL_OK")
</pallas_src>

<mosaic_0001>
module attributes {stable_mosaic.version = 11 : i64} {
  func.func @_two_stage_average_kernel(%arg0: i32, %arg1: i32, %arg2: memref<2x128x4xf32, #tpu.memory_space<vmem>>, %arg3: memref<4x128xf32, #tpu.memory_space<vmem>>, %arg4: memref<1x128xf32, #tpu.memory_space<vmem>>, %arg5: memref<2x128xf32, #tpu.memory_space<vmem>>, %arg6: memref<2x4xf32, #tpu.memory_space<vmem>>) attributes {dimension_semantics = [#tpu.dimension_semantics<parallel>, #tpu.dimension_semantics<arbitrary>], iteration_bounds = array<i64: 1, 2>, scalar_prefetch = 0 : i64, scratch_operands = 1 : i64, tpu.core_type = #tpu.core_type<tc>, window_params = [{transform_indices = @transform_0, window_bounds = array<i64: 2, 128, 4>}, {pipeline_mode = #tpu.pipeline_mode<synchronous>, transform_indices = @transform_1, window_bounds = array<i64: 4, 128>}, {pipeline_mode = #tpu.pipeline_mode<synchronous>, transform_indices = @transform_2, window_bounds = array<i64: 1, 128>}, {transform_indices = @transform_3, window_bounds = array<i64: 2, 128>}]} {
    %c0_i32 = arith.constant 0 : i32
    %0 = arith.cmpi eq, %arg1, %c0_i32 : i32
    %1 = arith.extui %0 : i1 to i32
    %c0_i32_0 = arith.constant 0 : i32
    %2 = arith.cmpi ne, %1, %c0_i32_0 : i32
    scf.if %2 {
      %cst_8 = arith.constant 0.000000e+00 : f32
      %11 = vector.broadcast %cst_8 : f32 to vector<2x4xf32>
      %c0_9 = arith.constant 0 : index
      %c0_10 = arith.constant 0 : index
      %12 = vector.load %arg6[%c0_9, %c0_10] : memref<2x4xf32, #tpu.memory_space<vmem>>, vector<2x4xf32>
      tpu.vector_store %arg6[%c0_9, %c0_10], %11 {strides = array<i32>} : memref<2x4xf32, #tpu.memory_space<vmem>>, vector<2x4xf32>,
    } else {
    }
    %c0 = arith.constant 0 : index
    %c0_1 = arith.constant 0 : index
    %3 = vector.load %arg6[%c0, %c0_1] : memref<2x4xf32, #tpu.memory_space<vmem>>, vector<2x4xf32>
    %c0_2 = arith.constant 0 : index
    %c0_3 = arith.constant 0 : index
    %c0_4 = arith.constant 0 : index
    %4 = vector.load %arg2[%c0_2, %c0_3, %c0_4] : memref<2x128x4xf32, #tpu.memory_space<vmem>>, vector<2x128x4xf32>
    %cst = arith.constant dense<0.000000e+00> : vector<2x4xf32>
    %5 = vector.multi_reduction <add>, %4, %cst [1] : vector<2x128x4xf32> to vector<2x4xf32>
    %6 = arith.addf %3, %5 : vector<2x4xf32>
    %c0_5 = arith.constant 0 : index
    %c0_6 = arith.constant 0 : index
    %7 = vector.load %arg6[%c0_5, %c0_6] : memref<2x4xf32, #tpu.memory_space<vmem>>, vector<2x4xf32>
    tpu.vector_store %arg6[%c0_5, %c0_6], %6 {strides = array<i32>} : memref<2x4xf32, #tpu.memory_space<vmem>>, vector<2x4xf32>,
    %c1_i32 = arith.constant 1 : i32
    %8 = arith.cmpi eq, %arg1, %c1_i32 : i32
    %9 = arith.extui %8 : i1 to i32
    %c0_i32_7 = arith.constant 0 : i32
    %10 = arith.cmpi ne, %9, %c0_i32_7 : i32
    scf.if %10 {
      %c0_8 = arith.constant 0 : index
      %c0_9 = arith.constant 0 : index
      %11 = vector.load %arg6[%c0_8, %c0_9] : memref<2x4xf32, #tpu.memory_space<vmem>>, vector<2x4xf32>
      %c0_10 = arith.constant 0 : index
      %c0_11 = arith.constant 0 : index
      %12 = vector.load %arg3[%c0_10, %c0_11] : memref<4x128xf32, #tpu.memory_space<vmem>>, vector<4x128xf32>
      %cst_12 = arith.constant dense<0.000000e+00> : vector<2x128xf32>
      %13 = tpu.matmul %11, %12, %cst_12 {dimension_numbers = #tpu.dot_dimension_numbers<[1], [0], [0], [1], [0, 0, 1, 1], [], []>} : vector<2x4xf32>, vector<4x128xf32>, vector<2x128xf32> -> vector<2x128xf32>
      %c0_13 = arith.constant 0 : index
      %c0_14 = arith.constant 0 : index
      %14 = vector.load %arg4[%c0_13, %c0_14] : memref<1x128xf32, #tpu.memory_space<vmem>>, vector<1x128xf32>
      %15 = vector.broadcast %14 : vector<1x128xf32> to vector<2x128xf32>
      %16 = arith.addf %13, %15 : vector<2x128xf32>
      %c0_15 = arith.constant 0 : index
      %c0_16 = arith.constant 0 : index
      %17 = vector.load %arg5[%c0_15, %c0_16] : memref<2x128xf32, #tpu.memory_space<vmem>>, vector<2x128xf32>
      tpu.vector_store %arg5[%c0_15, %c0_16], %16 {strides = array<i32>} : memref<2x128xf32, #tpu.memory_space<vmem>>, vector<2x128xf32>,
    } else {
    }
    return
  }
  func.func @transform_0(%arg0: i32, %arg1: i32) -> (i32, i32, i32) {
    %c0_i32 = arith.constant 0 : i32
    %c0_i32_0 = arith.constant 0 : i32
    return %arg0, %arg1, %c0_i32 : i32, i32, i32
  }
  func.func @transform_1(%arg0: i32, %arg1: i32) -> (i32, i32) {
    %c0_i32 = arith.constant 0 : i32
    %c0_i32_0 = arith.constant 0 : i32
    %c0_i32_1 = arith.constant 0 : i32
    return %c0_i32, %c0_i32_0 : i32, i32
  }
  func.func @transform_2(%arg0: i32, %arg1: i32) -> (i32, i32) {
    %c0_i32 = arith.constant 0 : i32
    %c0_i32_0 = arith.constant 0 : i32
    %c0_i32_1 = arith.constant 0 : i32
    return %c0_i32, %c0_i32_0 : i32, i32
  }
  func.func @transform_3(%arg0: i32, %arg1: i32) -> (i32, i32) {
    %c0_i32 = arith.constant 0 : i32
    %c0_i32_0 = arith.constant 0 : i32
    return %arg0, %c0_i32 : i32, i32
  }
}

</mosaic_0001>

<llo_original>
// kernel: tpu_custom_call.1
$region0: #{tpu_custom_call.1}
  #allocation0 [shape = 'u32[]', space=smem, size = 0x4, offset = 0x4, fixed_abs, tag = 'smem constant byte address 0x4 - core index']
  #allocation1 [shape = 'u32[144,128]{1,0:T(1,128)}', space=vmem, size = 0x12000, scoped, tag = 'internal scratch']
  #allocation2 [shape = 'f32[2,4]{1,0:T(2,128)}', space=vmem, size = 0x400, scoped, tag = 'scratch operand']
  %s0 = inlined_call_operand.vmem [shape: f32[2,256,4], index: 0, kind: input, shape index: {}]
  %s1 = inlined_call_operand.vmem [shape: f32[4,128], index: 1, kind: input, shape index: {}]
  %s2 = inlined_call_operand.vmem [shape: f32[1,128], index: 2, kind: input, shape index: {}]
  %s3 = inlined_call_operand.hbm [shape: f32[2,128], index: 3, kind: output, shape index: {}]
  %s4 = sld [smem:[#allocation0]]
  $region91: #{tpu_custom_call.1} parent=0
    _
  %s6 = ssub.s32 1, %s4
  %s7 = scalar_select 0, %s6, %s4
  $region1: #{tpu_custom_call.1} parent=0
    #allocation3 [shape = 'u8[262144]{0}', space=vmem, size = 0x40000, scoped, tag = 'input window, operand 0']
    #allocation4 [shape = 'u8[1024]{0}', space=vmem, size = 0x400, scoped, tag = 'output window, operand 0, single buffered']
    #allocation5 [shape = 's32[2]{0}', space=sflag, size = 0x8, scoped, tag = 'scoped memory for tpu_custom_call.1']
    %8 = vsyncpa [#allocation5], 0
    loop: start=0, step=1, limit=4
    $region2: #{tpu_custom_call.1} parent=1 // loop_pre_header
      _
    $region3: #{tpu_custom_call.1} parent=1 // loop_header
      %s10 = sphi 0, %s14
      %p11 = scmp.ge.s32.totalorder %s10, 4
      %s17 = sphi 0, %s29
      %s18 = sphi 0, %s25
      %s19 = sphi 0, %s17
      %s20 = sphi 0, %s18
      %s21 = sphi 0, %s19
      %s22 = sphi 0, %s20
      %s34 = sphi 0, %s36
      %s37 = sphi 0, %s34
      %s38 = sphi 0, %s37
      %s54 = sphi 0, %s38
      %s58 = sphi 0, %s58
      %s60 = sphi 0, %s58
      %s61 = sphi 0, %s60
      %s75 = sphi 0, %s61
      %s79 = sphi 0, %s79
      %s81 = sphi 0, %s79
      %s82 = sphi 0, %s81
      %s96 = sphi 0, %s82
      %s102 = sphi 0, %s104
      %s105 = sphi 0, %s102
      %s106 = sphi 0, %s105
      %s122 = sphi 0, %s106
    $region4: #{tpu_custom_call.1} parent=1 // loop_header_branch
      %13 = sbr.rel (%p11) target = $region8
    $region5: #{tpu_custom_call.1} parent=1 // loop_body
      %s15 = ssub.s32 %s10, 1
      %s16 = ssub.s32 %s10, 2
      %s23 = sadd.s32 1, %s18
      %p24 = scmp.ge.s32.totalorder %s23, 2
      %s25 = scalar_select %p24, 0, %s23
      %s26 = sadd.s32 1, %s17
      %s27 = scalar_select %p24, %s26, %s17
      %p28 = scmp.ge.s32.totalorder %s27, 1
      %s29 = scalar_select %p28, 0, %s27
      %s30 = ssub.s32 %s17, %s29
      %s31 = ssub.s32 %s18, %s25
      %s32 = sor.u32 %s30, %s31
      %p33 = scmp.eq.s32.totalorder %s32, 0
      %s35 = sadd.s32 %s34, 1
      %s36 = scalar_select %p33, %s34, %s35
      %p39 = pneg %p33
      %p40 = scmp.eq.s32.totalorder %s10, 1
      %p41 = por %p39, %p40
      %p42 = scmp.ne.s32.totalorder %s34, %s37
      %p43 = scmp.eq.s32.totalorder %s10, 0
      %p44 = por %p42, %p43
      %p45 = scmp.ne.s32.totalorder %s34, %s37
      %p46 = scmp.eq.s32.totalorder %s15, 1
      %p47 = por %p45, %p46
      %p48 = scmp.ne.s32.totalorder %s37, %s38
      %p49 = scmp.eq.s32.totalorder %s15, 0
      %p50 = por %p48, %p49
      %p51 = scmp.ne.s32.totalorder %s37, %s38
      %p52 = scmp.eq.s32.totalorder %s16, 1
      %p53 = por %p51, %p52
      %p55 = scmp.ne.s32.totalorder %s38, %s54
      %p56 = scmp.eq.s32.totalorder %s16, 0
      %p57 = por %p55, %p56
      %s59 = sadd.s32 %s58, 1
      %p62 = scmp.eq.s32.totalorder %s10, 1
      %p63 = scmp.ne.s32.totalorder %s58, %s60
      %p64 = scmp.eq.s32.totalorder %s10, 0
      %p65 = por %p63, %p64
      %p66 = scmp.ne.s32.totalorder %s58, %s60
      %p67 = scmp.eq.s32.totalorder %s15, 1
      %p68 = por %p66, %p67
      %p69 = scmp.ne.s32.totalorder %s60, %s61
      %p70 = scmp.eq.s32.totalorder %s15, 0
      %p71 = por %p69, %p70
      %p72 = scmp.ne.s32.totalorder %s60, %s61
      %p73 = scmp.eq.s32.totalorder %s16, 1
      %p74 = por %p72, %p73
      %p76 = scmp.ne.s32.totalorder %s61, %s75
      %p77 = scmp.eq.s32.totalorder %s16, 0
      %p78 = por %p76, %p77
      %s80 = sadd.s32 %s79, 1
      %p83 = scmp.eq.s32.totalorder %s10, 1
      %p84 = scmp.ne.s32.totalorder %s79, %s81
      %p85 = scmp.eq.s32.totalorder %s10, 0
      %p86 = por %p84, %p85
      %p87 = scmp.ne.s32.totalorder %s79, %s81
      %p88 = scmp.eq.s32.totalorder %s15, 1
      %p89 = por %p87, %p88
      %p90 = scmp.ne.s32.totalorder %s81, %s82
      %p91 = scmp.eq.s32.totalorder %s15, 0
      %p92 = por %p90, %p91
      %p93 = scmp.ne.s32.totalorder %s81, %s82
      %p94 = scmp.eq.s32.totalorder %s16, 1
      %p95 = por %p93, %p94
      %p97 = scmp.ne.s32.totalorder %s82, %s96
      %p98 = scmp.eq.s32.totalorder %s16, 0
      %p99 = por %p97, %p98
      %s100 = ssub.s32 %s17, %s29
      %p101 = scmp.eq.s32.totalorder %s100, 0
      %s103 = sadd.s32 %s102, 1
      %s104 = scalar_select %p101, %s102, %s103
      %p107 = pneg %p101
      %p108 = scmp.eq.s32.totalorder %s10, 1
      %p109 = por %p107, %p108
      %p110 = scmp.ne.s32.totalorder %s102, %s105
      %p111 = scmp.eq.s32.totalorder %s10, 0
      %p112 = por %p110, %p111
      %p113 = scmp.ne.s32.totalorder %s102, %s105
      %p114 = scmp.eq.s32.totalorder %s15, 1
      %p115 = por %p113, %p114
      %p116 = scmp.ne.s32.totalorder %s105, %s106
      %p117 = scmp.eq.s32.totalorder %s15, 0
      %p118 = por %p116, %p117
      %p119 = scmp.ne.s32.totalorder %s105, %s106
      %p120 = scmp.eq.s32.totalorder %s16, 1
      %p121 = por %p119, %p120
      %p123 = scmp.ne.s32.totalorder %s106, %s122
      %p124 = scmp.eq.s32.totalorder %s16, 0
      %p125 = por %p123, %p124
      %p126 = scmp.le.s32.totalorder 1, %s10
      %p127 = scmp.lt.s32.totalorder %s10, 3
      %p128 = pnand %p126, %p127
      %p129 = pneg %p128
      // Predicated region
      $region9: #{tpu_custom_call.1} parent=5 // pred_check
        _
      $region10: #{tpu_custom_call.1} parent=5 // pred_check_branch
        %131 = sbr.rel (%p128) target = $region12
      $region11: #{tpu_custom_call.1} parent=5 // pred_region
        %s132 = ssub.s32 %s10, 1
        // Predicated region
        $region13: #{tpu_custom_call.1} parent=11 // pred_check
          %p133 = pneg %p71
        $region14: #{tpu_custom_call.1} parent=11 // pred_check_branch
          %135 = sbr.rel (%p133) target = $region16
        $region15: #{tpu_custom_call.1} parent=11 // pred_region
          _
        $region16: #{tpu_custom_call.1} parent=11 // pred_fallthru
          _
        // Predicated region
        $region17: #{tpu_custom_call.1} parent=11 // pred_check
          %p136 = pneg %p92
        $region18: #{tpu_custom_call.1} parent=11 // pred_check_branch
          %138 = sbr.rel (%p136) target = $region20
        $region19: #{tpu_custom_call.1} parent=11 // pred_region
          _
        $region20: #{tpu_custom_call.1} parent=11 // pred_fallthru
          _
      $region12: #{tpu_custom_call.1} parent=5 // pred_fallthru
        _
      %p139 = scmp.lt.s32.totalorder %s10, 2
      // Predicated region
      $region21: #{tpu_custom_call.1} parent=5 // pred_check
        %p140 = pneg %p139
      $region22: #{tpu_custom_call.1} parent=5 // pred_check_branch
        %142 = sbr.rel (%p140) target = $region24
      $region23: #{tpu_custom_call.1} parent=5 // pred_region
        // Predicated region
        $region25: #{tpu_custom_call.1} parent=23 // pred_check
          %p143 = pneg %p44
        $region26: #{tpu_custom_call.1} parent=23 // pred_check_branch
          %145 = sbr.rel (%p143) target = $region28
        $region27: #{tpu_custom_call.1} parent=23 // pred_region
          %s146 = sand.u32 %s34, 1
          %s147 = sand.u32 %s34, 1
          %s148 = smul.addr %s147, 256
          %s149 = scalar_lea.vmem [#allocation3], %s148
          %s150 = smul.u32 2, %s17
          %s151 = smul.u32 16, %s18
          %s152 = smul.addr %s150, 32
          %s153 = sadd.s32 %s151, %s152
          %s154 = smul.addr %s153, 8
          %s155 = scalar_lea.vmem %s0, %s154
          // Predicated region
          $region29: #{tpu_custom_call.1} parent=27 // pred_check
            _
          $region30: #{tpu_custom_call.1} parent=27 // pred_check_branch
            %157 = sbr.rel (0) target = $region32
          $region31: #{tpu_custom_call.1} parent=27 // pred_region
            // Predicated region
            $region33: #{tpu_custom_call.1} parent=31 // pred_check
              _
            $region34: #{tpu_custom_call.1} parent=31 // pred_check_branch
              %159 = sbr.rel (0) target = $region36
            $region35: #{tpu_custom_call.1} parent=31 // pred_region
              // Predicated region
              $region48: #{tpu_custom_call.1} parent=35 // pred_check
                _
              $region49: #{tpu_custom_call.1} parent=35 // pred_check_branch
                %236 = sbr.rel (0) target = $region51
              $region50: #{tpu_custom_call.1} parent=35 // pred_region
                loop: start=0, step=1, limit=1
                $region52: #{tpu_custom_call.1} parent=50 // loop_pre_header
                  _
                $region53: #{tpu_custom_call.1} parent=50 // loop_header
                  %s238 = sphi 0, %s242
                  %p239 = scmp.ge.s32.totalorder %s238, 1
                  %s243 = sphi %s155, %s155
                  %s244 = sphi %s149, %s149
                $region54: #{tpu_custom_call.1} parent=50 // loop_header_branch
                  %241 = sbr.rel (%p239) target = $region58
                $region55: #{tpu_custom_call.1} parent=50 // loop_body
                  %v245 = vld [vmem:[%s243] sm:$0xff]
                  %246 = vst [vmem:[%s244] sm:$0xff] %v245
                  %v247 = vld [vmem:[%s243 + $0x8] sm:$0xff]
                  %248 = vst [vmem:[%s244 + $0x8] sm:$0xff] %v247
                  %v249 = vld [vmem:[%s243 + $0x10] sm:$0xff]
                  %250 = vst [vmem:[%s244 + $0x10] sm:$0xff] %v249
                  %v251 = vld [vmem:[%s243 + $0x18] sm:$0xff]
                  %252 = vst [vmem:[%s244 + $0x18] sm:$0xff] %v251
                  %v253 = vld [vmem:[%s243 + $0x20] sm:$0xff]
                  %254 = vst [vmem:[%s244 + $0x20] sm:$0xff] %v253
                  %v255 = vld [vmem:[%s243 + $0x28] sm:$0xff]
                  %256 = vst [vmem:[%s244 + $0x28] sm:$0xff] %v255
                  %v257 = vld [vmem:[%s243 + $0x30] sm:$0xff]
                  %258 = vst [vmem:[%s244 + $0x30] sm:$0xff] %v257
                  %v259 = vld [vmem:[%s243 + $0x38] sm:$0xff]
                  %260 = vst [vmem:[%s244 + $0x38] sm:$0xff] %v259
                  %v261 = vld [vmem:[%s243 + $0x40] sm:$0xff]
                  %262 = vst [vmem:[%s244 + $0x40] sm:$0xff] %v261
                  %v263 = vld [vmem:[%s243 + $0x48] sm:$0xff]
                  %264 = vst [vmem:[%s244 + $0x48] sm:$0xff] %v263
                  %v265 = vld [vmem:[%s243 + $0x50] sm:$0xff]
                  %266 = vst [vmem:[%s244 + $0x50] sm:$0xff] %v265
                  %v267 = vld [vmem:[%s243 + $0x58] sm:$0xff]
                  %268 = vst [vmem:[%s244 + $0x58] sm:$0xff] %v267
                  %v269 = vld [vmem:[%s243 + $0x60] sm:$0xff]
                  %270 = vst [vmem:[%s244 + $0x60] sm:$0xff] %v269
                  %v271 = vld [vmem:[%s243 + $0x68] sm:$0xff]
                  %272 = vst [vmem:[%s244 + $0x68] sm:$0xff] %v271
                  %v273 = vld [vmem:[%s243 + $0x70] sm:$0xff]
                  %274 = vst [vmem:[%s244 + $0x70] sm:$0xff] %v273
                  %v275 = vld [vmem:[%s243 + $0x78] sm:$0xff]
                  %276 = vst [vmem:[%s244 + $0x78] sm:$0xff] %v275
                  %v277 = vld [vmem:[%s243 + $0x100] sm:$0xff]
                  %278 = vst [vmem:[%s244 + $0x80] sm:$0xff] %v277
                  %v279 = vld [vmem:[%s243 + $0x108] sm:$0xff]
                  %280 = vst [vmem:[%s244 + $0x88] sm:$0xff] %v279
                  %v281 = vld [vmem:[%s243 + $0x110] sm:$0xff]
                  %282 = vst [vmem:[%s244 + $0x90] sm:$0xff] %v281
                  %v283 = vld [vmem:[%s243 + $0x118] sm:$0xff]
                  %284 = vst [vmem:[%s244 + $0x98] sm:$0xff] %v283
                  %v285 = vld [vmem:[%s243 + $0x120] sm:$0xff]
                  %286 = vst [vmem:[%s244 + $0xa0] sm:$0xff] %v285
                  %v287 = vld [vmem:[%s243 + $0x128] sm:$0xff]
                  %288 = vst [vmem:[%s244 + $0xa8] sm:$0xff] %v287
                  %v289 = vld [vmem:[%s243 + $0x130] sm:$0xff]
                  %290 = vst [vmem:[%s244 + $0xb0] sm:$0xff] %v289
                  %v291 = vld [vmem:[%s243 + $0x138] sm:$0xff]
                  %292 = vst [vmem:[%s244 + $0xb8] sm:$0xff] %v291
                  %v293 = vld [vmem:[%s243 + $0x140] sm:$0xff]
                  %294 = vst [vmem:[%s244 + $0xc0] sm:$0xff] %v293
                  %v295 = vld [vmem:[%s243 + $0x148] sm:$0xff]
                  %296 = vst [vmem:[%s244 + $0xc8] sm:$0xff] %v295
                  %v297 = vld [vmem:[%s243 + $0x150] sm:$0xff]
                  %298 = vst [vmem:[%s244 + $0xd0] sm:$0xff] %v297
                  %v299 = vld [vmem:[%s243 + $0x158] sm:$0xff]
                  %300 = vst [vmem:[%s244 + $0xd8] sm:$0xff] %v299
                  %v301 = vld [vmem:[%s243 + $0x160] sm:$0xff]
                  %302 = vst [vmem:[%s244 + $0xe0] sm:$0xff] %v301
                  %v303 = vld [vmem:[%s243 + $0x168] sm:$0xff]
                  %304 = vst [vmem:[%s244 + $0xe8] sm:$0xff] %v303
                  %v305 = vld [vmem:[%s243 + $0x170] sm:$0xff]
                  %306 = vst [vmem:[%s244 + $0xf0] sm:$0xff] %v305
                  %v307 = vld [vmem:[%s243 + $0x178] sm:$0xff]
                  %308 = vst [vmem:[%s244 + $0xf8] sm:$0xff] %v307
                $region56: #{tpu_custom_call.1} parent=50 // loop_footer
                  %s242 = sadd.s32 1, %s238
                $region57: #{tpu_custom_call.1} parent=50 // loop_footer_branch
                  %237 = sbr.rel target = $region53
                $region58: #{tpu_custom_call.1} parent=50 // loop_exit
                  _
              $region51: #{tpu_custom_call.1} parent=35 // pred_fallthru
                _
              // Predicated region
              $region59: #{tpu_custom_call.1} parent=35 // pred_check
                _
              $region60: #{tpu_custom_call.1} parent=35 // pred_check_branch
                %310 = sbr.rel target = $region62
              $region61: #{tpu_custom_call.1} parent=35 // pred_region
                _
              $region62: #{tpu_custom_call.1} parent=35 // pred_fallthru
                _
            $region36: #{tpu_custom_call.1} parent=31 // pred_fallthru
              _
            // Predicated region
            $region37: #{tpu_custom_call.1} parent=31 // pred_check
              _
            $region38: #{tpu_custom_call.1} parent=31 // pred_check_branch
              %161 = sbr.rel target = $region40
            $region39: #{tpu_custom_call.1} parent=31 // pred_region
              loop: start=0, step=1, limit=1
              $region41: #{tpu_custom_call.1} parent=39 // loop_pre_header
                _
              $region42: #{tpu_custom_call.1} parent=39 // loop_header
                %s164 = sphi 0, %s168
                %p165 = scmp.ge.s32.totalorder %s164, 1
                %s169 = sphi %s155, %s155
                %s170 = sphi %s149, %s149
              $region43: #{tpu_custom_call.1} parent=39 // loop_header_branch
                %167 = sbr.rel (%p165) target = $region47
              $region44: #{tpu_custom_call.1} parent=39 // loop_body
                %v171 = vld [vmem:[%s169] sm:$0xff]
                %172 = vst [vmem:[%s170] sm:$0xff] %v171
                %v173 = vld [vmem:[%s169 + $0x8] sm:$0xff]
                %174 = vst [vmem:[%s170 + $0x8] sm:$0xff] %v173
                %v175 = vld [vmem:[%s169 + $0x10] sm:$0xff]
                %176 = vst [vmem:[%s170 + $0x10] sm:$0xff] %v175
                %v177 = vld [vmem:[%s169 + $0x18] sm:$0xff]
                %178 = vst [vmem:[%s170 + $0x18] sm:$0xff] %v177
                %v179 = vld [vmem:[%s169 + $0x20] sm:$0xff]
                %180 = vst [vmem:[%s170 + $0x20] sm:$0xff] %v179
                %v181 = vld [vmem:[%s169 + $0x28] sm:$0xff]
                %182 = vst [vmem:[%s170 + $0x28] sm:$0xff] %v181
                %v183 = vld [vmem:[%s169 + $0x30] sm:$0xff]
                %184 = vst [vmem:[%s170 + $0x30] sm:$0xff] %v183
                %v185 = vld [vmem:[%s169 + $0x38] sm:$0xff]
                %186 = vst [vmem:[%s170 + $0x38] sm:$0xff] %v185
                %v187 = vld [vmem:[%s169 + $0x40] sm:$0xff]
                %188 = vst [vmem:[%s170 + $0x40] sm:$0xff] %v187
                %v189 = vld [vmem:[%s169 + $0x48] sm:$0xff]
                %190 = vst [vmem:[%s170 + $0x48] sm:$0xff] %v189
                %v191 = vld [vmem:[%s169 + $0x50] sm:$0xff]
                %192 = vst [vmem:[%s170 + $0x50] sm:$0xff] %v191
                %v193 = vld [vmem:[%s169 + $0x58] sm:$0xff]
                %194 = vst [vmem:[%s170 + $0x58] sm:$0xff] %v193
                %v195 = vld [vmem:[%s169 + $0x60] sm:$0xff]
                %196 = vst [vmem:[%s170 + $0x60] sm:$0xff] %v195
                %v197 = vld [vmem:[%s169 + $0x68] sm:$0xff]
                %198 = vst [vmem:[%s170 + $0x68] sm:$0xff] %v197
                %v199 = vld [vmem:[%s169 + $0x70] sm:$0xff]
                %200 = vst [vmem:[%s170 + $0x70] sm:$0xff] %v199
                %v201 = vld [vmem:[%s169 + $0x78] sm:$0xff]
                %202 = vst [vmem:[%s170 + $0x78] sm:$0xff] %v201
                %v203 = vld [vmem:[%s169 + $0x100] sm:$0xff]
                %204 = vst [vmem:[%s170 + $0x80] sm:$0xff] %v203
                %v205 = vld [vmem:[%s169 + $0x108] sm:$0xff]
                %206 = vst [vmem:[%s170 + $0x88] sm:$0xff] %v205
                %v207 = vld [vmem:[%s169 + $0x110] sm:$0xff]
                %208 = vst [vmem:[%s170 + $0x90] sm:$0xff] %v207
                %v209 = vld [vmem:[%s169 + $0x118] sm:$0xff]
                %210 = vst [vmem:[%s170 + $0x98] sm:$0xff] %v209
                %v211 = vld [vmem:[%s169 + $0x120] sm:$0xff]
                %212 = vst [vmem:[%s170 + $0xa0] sm:$0xff] %v211
                %v213 = vld [vmem:[%s169 + $0x128] sm:$0xff]
                %214 = vst [vmem:[%s170 + $0xa8] sm:$0xff] %v213
                %v215 = vld [vmem:[%s169 + $0x130] sm:$0xff]
                %216 = vst [vmem:[%s170 + $0xb0] sm:$0xff] %v215
                %v217 = vld [vmem:[%s169 + $0x138] sm:$0xff]
                %218 = vst [vmem:[%s170 + $0xb8] sm:$0xff] %v217
                %v219 = vld [vmem:[%s169 + $0x140] sm:$0xff]
                %220 = vst [vmem:[%s170 + $0xc0] sm:$0xff] %v219
                %v221 = vld [vmem:[%s169 + $0x148] sm:$0xff]
                %222 = vst [vmem:[%s170 + $0xc8] sm:$0xff] %v221
                %v223 = vld [vmem:[%s169 + $0x150] sm:$0xff]
                %224 = vst [vmem:[%s170 + $0xd0] sm:$0xff] %v223
                %v225 = vld [vmem:[%s169 + $0x158] sm:$0xff]
                %226 = vst [vmem:[%s170 + $0xd8] sm:$0xff] %v225
                %v227 = vld [vmem:[%s169 + $0x160] sm:$0xff]
                %228 = vst [vmem:[%s170 + $0xe0] sm:$0xff] %v227
                %v229 = vld [vmem:[%s169 + $0x168] sm:$0xff]
                %230 = vst [vmem:[%s170 + $0xe8] sm:$0xff] %v229
                %v231 = vld [vmem:[%s169 + $0x170] sm:$0xff]
                %232 = vst [vmem:[%s170 + $0xf0] sm:$0xff] %v231
                %v233 = vld [vmem:[%s169 + $0x178] sm:$0xff]
                %234 = vst [vmem:[%s170 + $0xf8] sm:$0xff] %v233
              $region45: #{tpu_custom_call.1} parent=39 // loop_footer
                %s168 = sadd.s32 1, %s164
              $region46: #{tpu_custom_call.1} parent=39 // loop_footer_branch
                %163 = sbr.rel target = $region42
              $region47: #{tpu_custom_call.1} parent=39 // loop_exit
                _
            $region40: #{tpu_custom_call.1} parent=31 // pred_fallthru
              _
          $region32: #{tpu_custom_call.1} parent=27 // pred_fallthru
            _
          %311 = vnop
        $region28: #{tpu_custom_call.1} parent=23 // pred_fallthru
          _
      $region24: #{tpu_custom_call.1} parent=5 // pred_fallthru
        _
      %p312 = scmp.le.s32.totalorder 1, %s10
      %p313 = scmp.lt.s32.totalorder %s10, 3
      %p314 = pnand %p312, %p313
      %p315 = pneg %p314
      // Predicated region
      $region63: #{tpu_custom_call.1} parent=5 // pred_check
        _
      $region64: #{tpu_custom_call.1} parent=5 // pred_check_branch
        %317 = sbr.rel (%p314) target = $region66
      $region65: #{tpu_custom_call.1} parent=5 // pred_region
        %s318 = ssub.s32 %s10, 1
        %s319 = sand.u32 %s37, 1
        %s320 = sand.u32 %s37, 1
        %s321 = smul.addr %s320, 256
        %s322 = scalar_lea.vmem [#allocation3], %s321
        // Predicated region
        $region67: #{tpu_custom_call.1} parent=65 // pred_check
          %p323 = pneg %p50
        $region68: #{tpu_custom_call.1} parent=65 // pred_check_branch
          %325 = sbr.rel (%p323) target = $region70
        $region69: #{tpu_custom_call.1} parent=65 // pred_region
          _
        $region70: #{tpu_custom_call.1} parent=65 // pred_fallthru
          _
        %s326 = sand.u32 %s37, 1
        %s327 = sand.u32 %s37, 1
        %s328 = smul.addr %s327, 256
        %s329 = scalar_lea.vmem [#allocation3], %s328
        %p330 = pneg %p50
        %p331 = pneg %p47
        %p332 = pneg %p71
        %p333 = pneg %p68
        %p334 = pneg %p92
        %p335 = pneg %p89
        %p336 = pneg %p118
        %p337 = pneg %p115
        %s338 = smul.u32 2, %s19
        %s339 = smul.u32 16, %s20
        %p340 = scmp.eq.s32.totalorder %s20, 0
        // Predicated region
        $region71: #{tpu_custom_call.1} parent=65 // pred_check
          %p341 = pneg %p340
        $region72: #{tpu_custom_call.1} parent=65 // pred_check_branch
          %343 = sbr.rel (%p341) target = $region74
        $region73: #{tpu_custom_call.1} parent=65 // pred_region
          %vm344 = vcmask 25600
          %345 = vst.msk [vmem:[#allocation2] sm:$0x3] %vm344, 0.0
        $region74: #{tpu_custom_call.1} parent=65 // pred_fallthru
          _
        %v346 = vld [vmem:[#allocation2] sm:$0x3]
        %v347 = vld [vmem:[%s322] sm:$0xff]
        %v348 = vld [vmem:[%s322 + $0x8] sm:$0xff]
        %v349 = vld [vmem:[%s322 + $0x10] sm:$0xff]
        %v350 = vld [vmem:[%s322 + $0x18] sm:$0xff]
        %v351 = vld [vmem:[%s322 + $0x20] sm:$0xff]
        %v352 = vld [vmem:[%s322 + $0x28] sm:$0xff]
        %v353 = vld [vmem:[%s322 + $0x30] sm:$0xff]
        %v354 = vld [vmem:[%s322 + $0x38] sm:$0xff]
        %v355 = vld [vmem:[%s322 + $0x40] sm:$0xff]
        %v356 = vld [vmem:[%s322 + $0x48] sm:$0xff]
        %v357 = vld [vmem:[%s322 + $0x50] sm:$0xff]
        %v358 = vld [vmem:[%s322 + $0x58] sm:$0xff]
        %v359 = vld [vmem:[%s322 + $0x60] sm:$0xff]
        %v360 = vld [vmem:[%s322 + $0x68] sm:$0xff]
        %v361 = vld [vmem:[%s322 + $0x70] sm:$0xff]
        %v362 = vld [vmem:[%s322 + $0x78] sm:$0xff]
        %v363 = vld [vmem:[%s322 + $0x80] sm:$0xff]
        %v364 = vld [vmem:[%s322 + $0x88] sm:$0xff]
        %v365 = vld [vmem:[%s322 + $0x90] sm:$0xff]
        %v366 = vld [vmem:[%s322 + $0x98] sm:$0xff]
        %v367 = vld [vmem:[%s322 + $0xa0] sm:$0xff]
        %v368 = vld [vmem:[%s322 + $0xa8] sm:$0xff]
        %v369 = vld [vmem:[%s322 + $0xb0] sm:$0xff]
        %v370 = vld [vmem:[%s322 + $0xb8] sm:$0xff]
        %v371 = vld [vmem:[%s322 + $0xc0] sm:$0xff]
        %v372 = vld [vmem:[%s322 + $0xc8] sm:$0xff]
        %v373 = vld [vmem:[%s322 + $0xd0] sm:$0xff]
        %v374 = vld [vmem:[%s322 + $0xd8] sm:$0xff]
        %v375 = vld [vmem:[%s322 + $0xe0] sm:$0xff]
        %v376 = vld [vmem:[%s322 + $0xe8] sm:$0xff]
        %v377 = vld [vmem:[%s322 + $0xf0] sm:$0xff]
        %v378 = vld [vmem:[%s322 + $0xf8] sm:$0xff]
        %vm379 = vcmask 31744
        %v380 = vsel %vm379, %v347, 0.0
        %v381 = vsel %vm379, %v348, 0.0
        %v382 = vadd.f32 %v380, %v381
        %v383 = vsel %vm379, %v349, 0.0
        %v384 = vadd.f32 %v382, %v383
        %v385 = vsel %vm379, %v350, 0.0
        %v386 = vadd.f32 %v384, %v385
        %v387 = vsel %vm379, %v351, 0.0
        %v388 = vadd.f32 %v386, %v387
        %v389 = vsel %vm379, %v352, 0.0
        %v390 = vadd.f32 %v388, %v389
        %v391 = vsel %vm379, %v353, 0.0
        %v392 = vadd.f32 %v390, %v391
        %v393 = vsel %vm379, %v354, 0.0
        %v394 = vadd.f32 %v392, %v393
        %v395 = vsel %vm379, %v355, 0.0
        %v396 = vadd.f32 %v394, %v395
        %v397 = vsel %vm379, %v356, 0.0
        %v398 = vadd.f32 %v396, %v397
        %v399 = vsel %vm379, %v357, 0.0
        %v400 = vadd.f32 %v398, %v399
        %v401 = vsel %vm379, %v358, 0.0
        %v402 = vadd.f32 %v400, %v401
        %v403 = vsel %vm379, %v359, 0.0
        %v404 = vadd.f32 %v402, %v403
        %v405 = vsel %vm379, %v360, 0.0
        %v406 = vadd.f32 %v404, %v405
        %v407 = vsel %vm379, %v361, 0.0
        %v408 = vadd.f32 %v406, %v407
        %v409 = vsel %vm379, %v362, 0.0
        %v410 = vadd.f32 %v408, %v409
        %v411 = vrot.slane %v410, 4
        %v412 = vadd.f32 %v410, %v411
        %v413 = vrot.slane %v412, 2
        %v414 = vadd.f32 %v412, %v413
        %v415 = vrot.slane %v414, 1
        %v416 = vadd.f32 %v414, %v415
        %v417 = vsel %vm379, %v363, 0.0
        %v418 = vsel %vm379, %v364, 0.0
        %v419 = vadd.f32 %v417, %v418
        %v420 = vsel %vm379, %v365, 0.0
        %v421 = vadd.f32 %v419, %v420
        %v422 = vsel %vm379, %v366, 0.0
        %v423 = vadd.f32 %v421, %v422
        %v424 = vsel %vm379, %v367, 0.0
        %v425 = vadd.f32 %v423, %v424
        %v426 = vsel %vm379, %v368, 0.0
        %v427 = vadd.f32 %v425, %v426
        %v428 = vsel %vm379, %v369, 0.0
        %v429 = vadd.f32 %v427, %v428
        %v430 = vsel %vm379, %v370, 0.0
        %v431 = vadd.f32 %v429, %v430
        %v432 = vsel %vm379, %v371, 0.0
        %v433 = vadd.f32 %v431, %v432
        %v434 = vsel %vm379, %v372, 0.0
        %v435 = vadd.f32 %v433, %v434
        %v436 = vsel %vm379, %v373, 0.0
        %v437 = vadd.f32 %v435, %v436
        %v438 = vsel %vm379, %v374, 0.0
        %v439 = vadd.f32 %v437, %v438
        %v440 = vsel %vm379, %v375, 0.0
        %v441 = vadd.f32 %v439, %v440
        %v442 = vsel %vm379, %v376, 0.0
        %v443 = vadd.f32 %v441, %v442
        %v444 = vsel %vm379, %v377, 0.0
        %v445 = vadd.f32 %v443, %v444
        %v446 = vsel %vm379, %v378, 0.0
        %v447 = vadd.f32 %v445, %v446
        %v448 = vrot.slane %v447, 4
        %v449 = vadd.f32 %v447, %v448
        %v450 = vrot.slane %v449, 2
        %v451 = vadd.f32 %v449, %v450
        %v452 = vrot.slane %v451, 1
        %v453 = vadd.f32 %v451, %v452
        %vm456 = vcmask 1041409
        %v457 = vsel %vm456, %v453, %v416
        %v459 = vadd.f32 %v346, %v457
        %vm460 = vcmask 25600
        %461 = vst.msk [vmem:[#allocation2] sm:$0x3] %vm460, %v459
        %p462 = scmp.eq.s32.totalorder %s20, 1
        // Predicated region
        $region75: #{tpu_custom_call.1} parent=65 // pred_check
          %p463 = pneg %p462
        $region76: #{tpu_custom_call.1} parent=65 // pred_check_branch
          %465 = sbr.rel (%p463) target = $region78
        $region77: #{tpu_custom_call.1} parent=65 // pred_region
          %v466 = vld [vmem:[#allocation2] sm:$0x3]
          %v467 = vld [vmem:[%s1] sm:$0xf]
          %v468 = vld [vmem:[%s2] sm:$0x1]
          %v470 = vlaneseq
          %v471 = vshrl.u32 %v470, 7
          %v472 = vsub.s32 0, %v471
          %v473 = vrot.slane %v468, %v472
          %v476 = vsel %vm379, %v466, 0
          %vm478 = vcmask 1043456
          %v480 = vsel %vm478, %v467, 0
          %482 = vmatprep.subr.mxu0 0.0
          %483 = vmatpush1.msra.mxu0 %v480
          %484 = vmatprep.subr.mxu0 0.0
          %485 = vmatpush1.msra.mxu0 0.0
          %486 = vmatprep.subr.mxu0 0.0
          %487 = vmatpush1.msra.mxu0 0.0
          %488 = vmatprep.subr.mxu0 0.0
          %489 = vmatpush1.msra.mxu0 0.0
          %490 = vmatprep.subr.mxu0 0.0
          %491 = vmatpush1.msra.mxu0 0.0
          %492 = vmatprep.subr.mxu0 0.0
          %493 = vmatpush1.msra.mxu0 0.0
          %494 = vmatprep.subr.mxu0 0.0
          %495 = vmatpush1.msra.mxu0 0.0
          %496 = vmatprep.subr.mxu0 0.0
          %497 = vmatpush1.msra.mxu0 0.0
          %498 = vmatprep.subr.mxu0 0.0
          %499 = vmatpush1.msra.mxu0 0.0
          %500 = vmatprep.subr.mxu0 0.0
          %501 = vmatpush1.msra.mxu0 0.0
          %502 = vmatprep.subr.mxu0 0.0
          %503 = vmatpush1.msra.mxu0 0.0
          %504 = vmatprep.subr.mxu0 0.0
          %505 = vmatpush1.msra.mxu0 0.0
          %506 = vmatprep.subr.mxu0 0.0
          %507 = vmatpush1.msra.mxu0 0.0
          %508 = vmatprep.subr.mxu0 0.0
          %509 = vmatpush1.msra.mxu0 0.0
          %510 = vmatprep.subr.mxu0 0.0
          %511 = vmatpush1.msra.mxu0 0.0
          %512 = vmatprep.subr.mxu0 0.0
          %513 = vmatpush1.msra.mxu0 0.0
          %514 = vmatprep.subr.mxu0 0.0
          %515 = vmatpush1.msra.mxu0 0.0
          %516 = vmatprep.subr.mxu0 0.0
          %517 = vmatpush1.msra.mxu0 0.0
          %518 = vmatprep.subr.mxu0 0.0
          %519 = vmatpush1.msra.mxu0 0.0
          %520 = vmatprep.subr.mxu0 0.0
          %521 = vmatpush1.msra.mxu0 0.0
          %522 = vmatprep.subr.mxu0 0.0
          %523 = vmatpush1.msra.mxu0 0.0
          %524 = vmatprep.subr.mxu0 0.0
          %525 = vmatpush1.msra.mxu0 0.0
          %526 = vmatprep.subr.mxu0 0.0
          %527 = vmatpush1.msra.mxu0 0.0
          %528 = vmatprep.subr.mxu0 0.0
          %529 = vmatpush1.msra.mxu0 0.0
          %530 = vmatprep.subr.mxu0 0.0
          %531 = vmatpush1.msra.mxu0 0.0
          %532 = vmatprep.subr.mxu0 0.0
          %533 = vmatpush1.msra.mxu0 0.0
          %534 = vmatprep.subr.mxu0 0.0
          %535 = vmatpush1.msra.mxu0 0.0
          %536 = vmatprep.subr.mxu0 0.0
          %537 = vmatpush1.msra.mxu0 0.0
          %538 = vmatprep.subr.mxu0 0.0
          %539 = vmatpush1.msra.mxu0 0.0
          %540 = vmatprep.subr.mxu0 0.0
          %541 = vmatpush1.msra.mxu0 0.0
          %542 = vmatprep.subr.mxu0 0.0
          %543 = vmatpush1.msra.mxu0 0.0
          %544 = vmatprep.subr.mxu0 0.0
          %545 = vmatpush1.msra.mxu0 0.0
          %546 = vmatprep.mubr.f32.mxu0 0.0
          %547 = vmatmul.mubr.f32.gmra.mrb[0].mxu0 %v476
          %v548 = vpop.f32.mrb[0].mxu0
          %v549 = vadd.f32 %v473, %v548
          %v550 = vpop.f32.mrb[0].mxu0
          %551 = vdwg.mxu0
          %552 = vst [vmem:[#allocation4] sm:$0x3] %v549
        $region78: #{tpu_custom_call.1} parent=65 // pred_fallthru
          _
        // Predicated region
        $region79: #{tpu_custom_call.1} parent=65 // pred_check
          %p553 = pneg %p115
        $region80: #{tpu_custom_call.1} parent=65 // pred_check_branch
          %555 = sbr.rel (%p553) target = $region82
        $region81: #{tpu_custom_call.1} parent=65 // pred_region
          %s557 = ssub.s32 32, 32
          %558 = vsyncadd [#allocation5], %s557
          %s559 = smul.addr %s19, 32
          %s560 = scalar_lea.hbm %s3, %s559
          %s562 = sshll.u32 [#allocation4], 4
          %s563 = int_to_ptr.vmem [resolvable:$true] %s562
          %565 = dma.vmem_to_hbm [thread:$0]  %s563, 32, %s560, [#allocation5]
        $region82: #{tpu_custom_call.1} parent=65 // pred_fallthru
          _
        // Predicated region
        $region83: #{tpu_custom_call.1} parent=65 // pred_check
          %p566 = pneg %p115
        $region84: #{tpu_custom_call.1} parent=65 // pred_check_branch
          %568 = sbr.rel (%p566) target = $region86
        $region85: #{tpu_custom_call.1} parent=65 // pred_region
          %569 = dma.done [#allocation5], 32
        $region86: #{tpu_custom_call.1} parent=65 // pred_fallthru
          _
      $region66: #{tpu_custom_call.1} parent=5 // pred_fallthru
        _
      %p570 = scmp.le.s32.totalorder 2, %s10
      // Predicated region
      $region87: #{tpu_custom_call.1} parent=5 // pred_check
        %p571 = pneg %p570
      $region88: #{tpu_custom_call.1} parent=5 // pred_check_branch
        %573 = sbr.rel (%p571) target = $region90
      $region89: #{tpu_custom_call.1} parent=5 // pred_region
        %s574 = ssub.s32 %s10, 2
      $region90: #{tpu_custom_call.1} parent=5 // pred_fallthru
        _
    $region6: #{tpu_custom_call.1} parent=1 // loop_footer
      %s14 = sadd.s32 1, %s10
    $region7: #{tpu_custom_call.1} parent=1 // loop_footer_branch
      %9 = sbr.rel target = $region3
    $region8: #{tpu_custom_call.1} parent=1 // loop_exit
      _
    %575 = vsyncpa [#allocation5], 1
    %s576 = scalar_lea.sflag [#allocation5], 1
    %577 = vsyncpa %s576, 1

</llo_original>
